<compile_context>
chip_gen: v6e
topology: v6e:2x2x1
jax: 0.10.0
libtpu: 0.0.40
codegen_flags: <defaults>
</compile_context>

<pallas_src>
import functools

import jax
import jax.numpy as jnp
from jax.experimental import pallas as pl
from jax.experimental.pallas import tpu as pltpu

_LANES = 1024          # lane-dense last dim (multiple of 128)
_MAX_BLOCK_ROWS = 512  # rows per tile -> 2 MiB f32 tiles
_NUM_SPLITS = 2        # leading "parallel" grid axis (2 TensorCores on v7x)


def _cdiv(a, b):
    return -(-a // b)


def _round_up(x, m):
    return _cdiv(x, m) * m


def _policy_loss_kernel(new_ref, old_ref, adv_ref, out_ref, acc_ref, *, eps):
    t = pl.program_id(1)

    @pl.when(t == 0)
    def _init():
        acc_ref[...] = jnp.zeros_like(acc_ref)

    # In-kernel upcast: callers may pass bf16/etc.; all math runs in f32.
    new = new_ref[...].astype(jnp.float32)
    old = old_ref[...].astype(jnp.float32)
    adv = adv_ref[...].astype(jnp.float32)

    ratio = jnp.exp(new - old)                         # EUP
    clipped = jnp.clip(ratio, 1.0 - eps, 1.0 + eps)    # VPU
    surrogate = jnp.minimum(ratio * adv, clipped * adv)

    # Lane-local partial reduction: fold the (block_rows, W) tile into the
    # (8, W) accumulator with pure VPU adds (no per-step cross-lane XLU work).
    # Slices are sublane-aligned (multiples of 8) -> no relayout copies.
    block_rows = surrogate.shape[0]
    part = surrogate[0:8, :]
    for i in range(1, block_rows // 8):
        part = part + surrogate[i * 8:(i + 1) * 8, :]
    acc_ref[...] += part

    @pl.when(t == pl.num_programs(1) - 1)
    def _finalize():
        out_ref[0] = acc_ref[...]


def policy_loss(new_log_probs, old_log_probs, advantage, action_mask=None, eps=0.2):
    """PPO clipped-surrogate loss; forward semantics match the PyTorch module.

    action_mask is accepted but unused (the reference forward ignores it), and
    is deliberately NOT passed into the Pallas kernel.
    """
    del action_mask  # not read by the reference forward pass

    shape = new_log_probs.shape
    n = 1
    for d in shape:
        n *= d

    w = _LANES
    rows = _cdiv(n, w)
    rows8 = _round_up(rows, 8)
    # Size row-blocks so both splits get work with minimal zero-padding
    # overshoot, capped at _MAX_BLOCK_ROWS for large inputs.
    block_rows = min(_MAX_BLOCK_ROWS, _round_up(_cdiv(rows8, _NUM_SPLITS), 8))
    tiles = _cdiv(rows8, block_rows)
    tiles_per_split = _cdiv(tiles, _NUM_SPLITS)
    rows_padded = _NUM_SPLITS * tiles_per_split * block_rows
    total = rows_padded * w

    def _prep(x):
        flat = x.reshape(-1)
        if total != n:
            # Zero padding: advantage==0 makes padded elements contribute
            # exactly 0 to the surrogate sum.  (Only hit when the element
            # count is not already slab-aligned.)
            flat = jnp.pad(flat, (0, total - n))
        return flat.reshape(rows_padded, w)

    inputs = (_prep(new_log_probs), _prep(old_log_probs), _prep(advantage))

    in_spec = pl.BlockSpec(
        (block_rows, w), lambda c, t: (c * tiles_per_split + t, 0))
    out_spec = pl.BlockSpec((1, 8, w), lambda c, t: (c, 0, 0))

    itemsize = jnp.dtype(new_log_probs.dtype).itemsize
    cost = pl.CostEstimate(
        flops=7 * total,
        transcendentals=total,
        bytes_accessed=3 * total * itemsize + _NUM_SPLITS * 8 * w * 4,
    )

    kernel = functools.partial(_policy_loss_kernel, eps=float(eps))

    partials = pl.pallas_call(
        kernel,
        out_shape=jax.ShapeDtypeStruct((_NUM_SPLITS, 8, w), jnp.float32),
        grid=(_NUM_SPLITS, tiles_per_split),
        in_specs=[in_spec, in_spec, in_spec],
        out_specs=out_spec,
        scratch_shapes=[pltpu.VMEM((8, w), jnp.float32)],
        compiler_params=pltpu.CompilerParams(
            dimension_semantics=("parallel", "arbitrary")),
        cost_estimate=cost,
    )(*inputs)

    # Tiny epilogue in XLA: cross-lane collapse of the (2, 8, W) partial sums,
    # then scale by -1/n (compile-time constant multiply, no divide).
    return -jnp.sum(partials) * (1.0 / n)


def _policy_loss_ref(new_lp, old_lp, adv, action_mask, eps=0.2):
    ratio = jnp.exp(new_lp - old_lp)
    surr = jnp.minimum(ratio * adv, jnp.clip(ratio, 1.0 - eps, 1.0 + eps) * adv)
    return jnp.mean(-surr)


if __name__ == "__main__":
    key = jax.random.PRNGKey(0)
    k1, k2, k3, k4 = jax.random.split(key, 4)

    batch, seq = 2, 8
    new_log_probs = jax.random.normal(k1, (batch, seq), dtype=jnp.float32) * 0.1 - 1.0
    old_log_probs = jax.random.normal(k2, (batch, seq), dtype=jnp.float32) * 0.1 - 1.0
    advantage = jax.random.normal(k3, (batch, seq), dtype=jnp.float32)
    action_mask = (jax.random.uniform(k4, (batch, seq)) > 0.2).astype(jnp.float32)

    loss = policy_loss(new_log_probs, old_log_probs, advantage, action_mask, eps=0.2)
    loss = jax.block_until_ready(loss)

    ref = _policy_loss_ref(new_log_probs, old_log_probs, advantage, action_mask, eps=0.2)
    assert jnp.allclose(loss, ref, atol=1e-5, rtol=1e-5), (loss, ref)

    print("KERNEL_OK")
</pallas_src>

<mosaic_0001>
module attributes {stable_mosaic.version = 11 : i64} {
  func.func @_policy_loss_kernel(%arg0: i32, %arg1: i32, %arg2: memref<8x1024xf32, #tpu.memory_space<vmem>>, %arg3: memref<8x1024xf32, #tpu.memory_space<vmem>>, %arg4: memref<8x1024xf32, #tpu.memory_space<vmem>>, %arg5: memref<1x8x1024xf32, #tpu.memory_space<vmem>>, %arg6: memref<8x1024xf32, #tpu.memory_space<vmem>>) attributes {dimension_semantics = [#tpu.dimension_semantics<parallel>, #tpu.dimension_semantics<arbitrary>], iteration_bounds = array<i64: 2, 1>, scalar_prefetch = 0 : i64, scratch_operands = 1 : i64, tpu.core_type = #tpu.core_type<tc>, window_params = [{transform_indices = @transform_0, window_bounds = array<i64: 8, 1024>}, {transform_indices = @transform_1, window_bounds = array<i64: 8, 1024>}, {transform_indices = @transform_2, window_bounds = array<i64: 8, 1024>}, {transform_indices = @transform_3, window_bounds = array<i64: 1, 8, 1024>}]} {
    %c0_i32 = arith.constant 0 : i32
    %0 = arith.cmpi eq, %arg1, %c0_i32 : i32
    %1 = arith.extui %0 : i1 to i32
    %c0_i32_0 = arith.constant 0 : i32
    %2 = arith.cmpi ne, %1, %c0_i32_0 : i32
    scf.if %2 {
      %cst_13 = arith.constant 0.000000e+00 : f32
      %21 = vector.broadcast %cst_13 : f32 to vector<8x1024xf32>
      %c0_14 = arith.constant 0 : index
      %c0_15 = arith.constant 0 : index
      %22 = vector.load %arg6[%c0_14, %c0_15] : memref<8x1024xf32, #tpu.memory_space<vmem>>, vector<8x1024xf32>
      tpu.vector_store %arg6[%c0_14, %c0_15], %21 {strides = array<i32>} : memref<8x1024xf32, #tpu.memory_space<vmem>>, vector<8x1024xf32>,
    } else {
    }
    %c0 = arith.constant 0 : index
    %c0_1 = arith.constant 0 : index
    %3 = vector.load %arg2[%c0, %c0_1] : memref<8x1024xf32, #tpu.memory_space<vmem>>, vector<8x1024xf32>
    %c0_2 = arith.constant 0 : index
    %c0_3 = arith.constant 0 : index
    %4 = vector.load %arg3[%c0_2, %c0_3] : memref<8x1024xf32, #tpu.memory_space<vmem>>, vector<8x1024xf32>
    %c0_4 = arith.constant 0 : index
    %c0_5 = arith.constant 0 : index
    %5 = vector.load %arg4[%c0_4, %c0_5] : memref<8x1024xf32, #tpu.memory_space<vmem>>, vector<8x1024xf32>
    %6 = arith.subf %3, %4 : vector<8x1024xf32>
    %7 = math.exp %6 : vector<8x1024xf32>
    %cst = arith.constant 8.000000e-01 : f32
    %cst_6 = arith.constant 1.200000e+00 : f32
    %8 = vector.broadcast %cst : f32 to vector<8x1024xf32>
    %9 = arith.maximumf %8, %7 : vector<8x1024xf32>
    %10 = vector.broadcast %cst_6 : f32 to vector<8x1024xf32>
    %11 = arith.minimumf %10, %9 : vector<8x1024xf32>
    %12 = arith.mulf %7, %5 : vector<8x1024xf32>
    %13 = arith.mulf %11, %5 : vector<8x1024xf32>
    %14 = arith.minimumf %12, %13 : vector<8x1024xf32>
    %c0_7 = arith.constant 0 : index
    %c0_8 = arith.constant 0 : index
    %15 = vector.load %arg6[%c0_7, %c0_8] : memref<8x1024xf32, #tpu.memory_space<vmem>>, vector<8x1024xf32>
    %16 = arith.addf %15, %14 : vector<8x1024xf32>
    %c0_9 = arith.constant 0 : index
    %c0_10 = arith.constant 0 : index
    %17 = vector.load %arg6[%c0_9, %c0_10] : memref<8x1024xf32, #tpu.memory_space<vmem>>, vector<8x1024xf32>
    tpu.vector_store %arg6[%c0_9, %c0_10], %16 {strides = array<i32>} : memref<8x1024xf32, #tpu.memory_space<vmem>>, vector<8x1024xf32>,
    %c0_i32_11 = arith.constant 0 : i32
    %18 = arith.cmpi eq, %arg1, %c0_i32_11 : i32
    %19 = arith.extui %18 : i1 to i32
    %c0_i32_12 = arith.constant 0 : i32
    %20 = arith.cmpi ne, %19, %c0_i32_12 : i32
    scf.if %20 {
      %c0_13 = arith.constant 0 : index
      %c0_14 = arith.constant 0 : index
      %21 = vector.load %arg6[%c0_13, %c0_14] : memref<8x1024xf32, #tpu.memory_space<vmem>>, vector<8x1024xf32>
      %c0_15 = arith.constant 0 : index
      %c0_16 = arith.constant 0 : index
      %c0_17 = arith.constant 0 : index
      %22 = vector.load %arg5[%c0_15, %c0_16, %c0_17] : memref<1x8x1024xf32, #tpu.memory_space<vmem>>, vector<1x8x1024xf32>
      %23 = vector.shape_cast %22 : vector<1x8x1024xf32> to vector<8x1024xf32>
      %24 = vector.shape_cast %21 : vector<8x1024xf32> to vector<1x8x1024xf32>
      tpu.vector_store %arg5[%c0_15, %c0_16, %c0_17], %24 {strides = array<i32>} : memref<1x8x1024xf32, #tpu.memory_space<vmem>>, vector<1x8x1024xf32>,
    } else {
    }
    return
  }
  func.func @transform_0(%arg0: i32, %arg1: i32) -> (i32, i32) {
    %c1_i32 = arith.constant 1 : i32
    %0 = arith.muli %arg0, %c1_i32 : i32
    %1 = arith.addi %0, %arg1 : i32
    %c0_i32 = arith.constant 0 : i32
    %c0_i32_0 = arith.constant 0 : i32
    return %1, %c0_i32 : i32, i32
  }
  func.func @transform_1(%arg0: i32, %arg1: i32) -> (i32, i32) {
    %c1_i32 = arith.constant 1 : i32
    %0 = arith.muli %arg0, %c1_i32 : i32
    %1 = arith.addi %0, %arg1 : i32
    %c0_i32 = arith.constant 0 : i32
    %c0_i32_0 = arith.constant 0 : i32
    return %1, %c0_i32 : i32, i32
  }
  func.func @transform_2(%arg0: i32, %arg1: i32) -> (i32, i32) {
    %c1_i32 = arith.constant 1 : i32
    %0 = arith.muli %arg0, %c1_i32 : i32
    %1 = arith.addi %0, %arg1 : i32
    %c0_i32 = arith.constant 0 : i32
    %c0_i32_0 = arith.constant 0 : i32
    return %1, %c0_i32 : i32, i32
  }
  func.func @transform_3(%arg0: i32, %arg1: i32) -> (i32, i32, i32) {
    %c0_i32 = arith.constant 0 : i32
    %c0_i32_0 = arith.constant 0 : i32
    %c0_i32_1 = arith.constant 0 : i32
    return %arg0, %c0_i32, %c0_i32_0 : i32, i32, i32
  }
}

</mosaic_0001>

<llo_original>
// kernel: tpu_custom_call.1
$region0: #{tpu_custom_call.1}
  #allocation0 [shape = 'u32[]', space=smem, size = 0x4, offset = 0x4, fixed_abs, tag = 'smem constant byte address 0x4 - core index']
  #allocation1 [shape = 'u32[144,128]{1,0:T(1,128)}', space=vmem, size = 0x12000, scoped, tag = 'internal scratch']
  #allocation2 [shape = 'f32[8,1024]{1,0:T(8,128)}', space=vmem, size = 0x8000, scoped, tag = 'scratch operand']
  %s0 = inlined_call_operand.hbm [shape: f32[16,1024], index: 0, kind: input, shape index: {}]
  %s1 = inlined_call_operand.hbm [shape: f32[16,1024], index: 1, kind: input, shape index: {}]
  %s2 = inlined_call_operand.hbm [shape: f32[16,1024], index: 2, kind: input, shape index: {}]
  %s3 = inlined_call_operand.hbm [shape: f32[2,8,1024], index: 3, kind: output, shape index: {}]
  %s4 = sld [smem:[#allocation0]]
  $region65: #{tpu_custom_call.1} parent=0
    _
  %s6 = ssub.s32 1, %s4
  %s7 = scalar_select 0, %s6, %s4
  $region1: #{tpu_custom_call.1} parent=0
    #allocation3 [shape = 'u8[65536]{0}', space=vmem, size = 0x10000, scoped, tag = 'input window, operand 0']
    #allocation4 [shape = 's32[2]{0}', space=sflag, size = 0x8, scoped, tag = 'scoped memory for tpu_custom_call.1']
    #allocation5 [shape = 's32[2]{0}', space=sflag, size = 0x8, scoped, tag = 'scoped memory for tpu_custom_call.1']
    #allocation6 [shape = 'u8[65536]{0}', space=vmem, size = 0x10000, scoped, tag = 'input window, operand 1']
    #allocation7 [shape = 's32[2]{0}', space=sflag, size = 0x8, scoped, tag = 'scoped memory for tpu_custom_call.1']
    #allocation8 [shape = 'u8[65536]{0}', space=vmem, size = 0x10000, scoped, tag = 'input window, operand 2']
    #allocation9 [shape = 'u8[65536]{0}', space=vmem, size = 0x10000, scoped, tag = 'output window, operand 0']
    %8 = vsyncpa [#allocation4], 0
    %s9 = scalar_lea.sflag [#allocation4], 1
    %10 = vsyncpa %s9, 0
    %11 = vsyncpa [#allocation7], 0
    %s12 = scalar_lea.sflag [#allocation7], 1
    %13 = vsyncpa %s12, 0
    %14 = vsyncpa [#allocation5], 0
    %s15 = scalar_lea.sflag [#allocation5], 1
    %16 = vsyncpa %s15, 0
    loop: start=0, step=1, limit=4
    $region2: #{tpu_custom_call.1} parent=1 // loop_pre_header
      _
    $region3: #{tpu_custom_call.1} parent=1 // loop_header
      %s18 = sphi 0, %s22
      %p19 = scmp.ge.s32.totalorder %s18, 4
      %s25 = sphi 0, %s37
      %s26 = sphi 0, %s33
      %s27 = sphi 0, %s25
      %s28 = sphi 0, %s26
      %s29 = sphi 0, %s27
      %s30 = sphi 0, %s28
      %s42 = sphi 0, %s44
      %s45 = sphi 0, %s42
      %s46 = sphi 0, %s45
      %s62 = sphi 0, %s46
      %s70 = sphi 0, %s72
      %s73 = sphi 0, %s70
      %s74 = sphi 0, %s73
      %s90 = sphi 0, %s74
      %s98 = sphi 0, %s100
      %s101 = sphi 0, %s98
      %s102 = sphi 0, %s101
      %s118 = sphi 0, %s102
      %s124 = sphi 0, %s126
      %s127 = sphi 0, %s124
      %s128 = sphi 0, %s127
      %s144 = sphi 0, %s128
    $region4: #{tpu_custom_call.1} parent=1 // loop_header_branch
      %21 = sbr.rel (%p19) target = $region8
    $region5: #{tpu_custom_call.1} parent=1 // loop_body
      %s23 = ssub.s32 %s18, 1
      %s24 = ssub.s32 %s18, 2
      %s31 = sadd.s32 1, %s26
      %p32 = scmp.ge.s32.totalorder %s31, 1
      %s33 = scalar_select %p32, 0, %s31
      %s34 = sadd.s32 1, %s25
      %s35 = scalar_select %p32, %s34, %s25
      %p36 = scmp.ge.s32.totalorder %s35, 2
      %s37 = scalar_select %p36, 0, %s35
      %s38 = sadd.s32 %s25, %s26
      %s39 = sadd.s32 %s37, %s33
      %s40 = ssub.s32 %s38, %s39
      %p41 = scmp.eq.s32.totalorder %s40, 0
      %s43 = sadd.s32 %s42, 1
      %s44 = scalar_select %p41, %s42, %s43
      %p47 = pneg %p41
      %p48 = scmp.eq.s32.totalorder %s18, 1
      %p49 = por %p47, %p48
      %p50 = scmp.ne.s32.totalorder %s42, %s45
      %p51 = scmp.eq.s32.totalorder %s18, 0
      %p52 = por %p50, %p51
      %p53 = scmp.ne.s32.totalorder %s42, %s45
      %p54 = scmp.eq.s32.totalorder %s23, 1
      %p55 = por %p53, %p54
      %p56 = scmp.ne.s32.totalorder %s45, %s46
      %p57 = scmp.eq.s32.totalorder %s23, 0
      %p58 = por %p56, %p57
      %p59 = scmp.ne.s32.totalorder %s45, %s46
      %p60 = scmp.eq.s32.totalorder %s24, 1
      %p61 = por %p59, %p60
      %p63 = scmp.ne.s32.totalorder %s46, %s62
      %p64 = scmp.eq.s32.totalorder %s24, 0
      %p65 = por %p63, %p64
      %s66 = sadd.s32 %s25, %s26
      %s67 = sadd.s32 %s37, %s33
      %s68 = ssub.s32 %s66, %s67
      %p69 = scmp.eq.s32.totalorder %s68, 0
      %s71 = sadd.s32 %s70, 1
      %s72 = scalar_select %p69, %s70, %s71
      %p75 = pneg %p69
      %p76 = scmp.eq.s32.totalorder %s18, 1
      %p77 = por %p75, %p76
      %p78 = scmp.ne.s32.totalorder %s70, %s73
      %p79 = scmp.eq.s32.totalorder %s18, 0
      %p80 = por %p78, %p79
      %p81 = scmp.ne.s32.totalorder %s70, %s73
      %p82 = scmp.eq.s32.totalorder %s23, 1
      %p83 = por %p81, %p82
      %p84 = scmp.ne.s32.totalorder %s73, %s74
      %p85 = scmp.eq.s32.totalorder %s23, 0
      %p86 = por %p84, %p85
      %p87 = scmp.ne.s32.totalorder %s73, %s74
      %p88 = scmp.eq.s32.totalorder %s24, 1
      %p89 = por %p87, %p88
      %p91 = scmp.ne.s32.totalorder %s74, %s90
      %p92 = scmp.eq.s32.totalorder %s24, 0
      %p93 = por %p91, %p92
      %s94 = sadd.s32 %s25, %s26
      %s95 = sadd.s32 %s37, %s33
      %s96 = ssub.s32 %s94, %s95
      %p97 = scmp.eq.s32.totalorder %s96, 0
      %s99 = sadd.s32 %s98, 1
      %s100 = scalar_select %p97, %s98, %s99
      %p103 = pneg %p97
      %p104 = scmp.eq.s32.totalorder %s18, 1
      %p105 = por %p103, %p104
      %p106 = scmp.ne.s32.totalorder %s98, %s101
      %p107 = scmp.eq.s32.totalorder %s18, 0
      %p108 = por %p106, %p107
      %p109 = scmp.ne.s32.totalorder %s98, %s101
      %p110 = scmp.eq.s32.totalorder %s23, 1
      %p111 = por %p109, %p110
      %p112 = scmp.ne.s32.totalorder %s101, %s102
      %p113 = scmp.eq.s32.totalorder %s23, 0
      %p114 = por %p112, %p113
      %p115 = scmp.ne.s32.totalorder %s101, %s102
      %p116 = scmp.eq.s32.totalorder %s24, 1
      %p117 = por %p115, %p116
      %p119 = scmp.ne.s32.totalorder %s102, %s118
      %p120 = scmp.eq.s32.totalorder %s24, 0
      %p121 = por %p119, %p120
      %s122 = ssub.s32 %s25, %s37
      %p123 = scmp.eq.s32.totalorder %s122, 0
      %s125 = sadd.s32 %s124, 1
      %s126 = scalar_select %p123, %s124, %s125
      %p129 = pneg %p123
      %p130 = scmp.eq.s32.totalorder %s18, 1
      %p131 = por %p129, %p130
      %p132 = scmp.ne.s32.totalorder %s124, %s127
      %p133 = scmp.eq.s32.totalorder %s18, 0
      %p134 = por %p132, %p133
      %p135 = scmp.ne.s32.totalorder %s124, %s127
      %p136 = scmp.eq.s32.totalorder %s23, 1
      %p137 = por %p135, %p136
      %p138 = scmp.ne.s32.totalorder %s127, %s128
      %p139 = scmp.eq.s32.totalorder %s23, 0
      %p140 = por %p138, %p139
      %p141 = scmp.ne.s32.totalorder %s127, %s128
      %p142 = scmp.eq.s32.totalorder %s24, 1
      %p143 = por %p141, %p142
      %p145 = scmp.ne.s32.totalorder %s128, %s144
      %p146 = scmp.eq.s32.totalorder %s24, 0
      %p147 = por %p145, %p146
      %p148 = scmp.le.s32.totalorder 1, %s18
      %p149 = scmp.lt.s32.totalorder %s18, 3
      %p150 = pnand %p148, %p149
      %p151 = pneg %p150
      // Predicated region
      $region9: #{tpu_custom_call.1} parent=5 // pred_check
        _
      $region10: #{tpu_custom_call.1} parent=5 // pred_check_branch
        %153 = sbr.rel (%p150) target = $region12
      $region11: #{tpu_custom_call.1} parent=5 // pred_region
        %s154 = ssub.s32 %s18, 1
      $region12: #{tpu_custom_call.1} parent=5 // pred_fallthru
        _
      %p155 = scmp.lt.s32.totalorder %s18, 2
      // Predicated region
      $region13: #{tpu_custom_call.1} parent=5 // pred_check
        %p156 = pneg %p155
      $region14: #{tpu_custom_call.1} parent=5 // pred_check_branch
        %158 = sbr.rel (%p156) target = $region16
      $region15: #{tpu_custom_call.1} parent=5 // pred_region
        // Predicated region
        $region17: #{tpu_custom_call.1} parent=15 // pred_check
          %p159 = pneg %p52
        $region18: #{tpu_custom_call.1} parent=15 // pred_check_branch
          %161 = sbr.rel (%p159) target = $region20
        $region19: #{tpu_custom_call.1} parent=15 // pred_region
          %s162 = sand.u32 %s42, 1
          %s163 = scalar_lea.sflag [#allocation4], %s162
          %s164 = sand.u32 %s42, 1
          %s165 = smul.addr %s164, 64
          %s166 = scalar_lea.vmem [#allocation3], %s165
          %s167 = sadd.s32 %s25, %s26
          %s169 = ssub.s32 1024, 1024
          %170 = vsyncadd %s163, %s169
          %s171 = smul.addr %s167, 8
          %s172 = smul.addr %s171, 128
          %s173 = scalar_lea.hbm %s0, %s172
          %s175 = sshll.u32 %s166, 4
          %s176 = int_to_ptr.vmem [resolvable:$true] %s175
          %178 = dma.hbm_to_vmem [thread:$0]  %s173, 1024, %s176, %s163
        $region20: #{tpu_custom_call.1} parent=15 // pred_fallthru
          _
        // Predicated region
        $region21: #{tpu_custom_call.1} parent=15 // pred_check
          %p179 = pneg %p80
        $region22: #{tpu_custom_call.1} parent=15 // pred_check_branch
          %181 = sbr.rel (%p179) target = $region24
        $region23: #{tpu_custom_call.1} parent=15 // pred_region
          %s182 = sand.u32 %s18, 1
          %s183 = scalar_lea.sflag [#allocation7], %s182
          %s184 = sand.u32 %s70, 1
          %s185 = smul.addr %s184, 64
          %s186 = scalar_lea.vmem [#allocation6], %s185
          %s187 = sadd.s32 %s25, %s26
          %s189 = ssub.s32 1024, 1024
          %190 = vsyncadd %s183, %s189
          %s191 = smul.addr %s187, 8
          %s192 = smul.addr %s191, 128
          %s193 = scalar_lea.hbm %s1, %s192
          %s195 = sshll.u32 %s186, 4
          %s196 = int_to_ptr.vmem [resolvable:$true] %s195
          %198 = dma.hbm_to_vmem [thread:$0]  %s193, 1024, %s196, %s183
        $region24: #{tpu_custom_call.1} parent=15 // pred_fallthru
          _
        // Predicated region
        $region25: #{tpu_custom_call.1} parent=15 // pred_check
          %p199 = pneg %p108
        $region26: #{tpu_custom_call.1} parent=15 // pred_check_branch
          %201 = sbr.rel (%p199) target = $region28
        $region27: #{tpu_custom_call.1} parent=15 // pred_region
          %s202 = sand.u32 %s18, 1
          %s203 = scalar_lea.sflag [#allocation7], %s202
          %s204 = sand.u32 %s98, 1
          %s205 = smul.addr %s204, 64
          %s206 = scalar_lea.vmem [#allocation8], %s205
          %s207 = sadd.s32 %s25, %s26
          %s209 = ssub.s32 1024, 1024
          %210 = vsyncadd %s203, %s209
          %s211 = smul.addr %s207, 8
          %s212 = smul.addr %s211, 128
          %s213 = scalar_lea.hbm %s2, %s212
          %s215 = sshll.u32 %s206, 4
          %s216 = int_to_ptr.vmem [resolvable:$true] %s215
          %218 = dma.hbm_to_vmem [thread:$0]  %s213, 1024, %s216, %s203
        $region28: #{tpu_custom_call.1} parent=15 // pred_fallthru
          _
      $region16: #{tpu_custom_call.1} parent=5 // pred_fallthru
        _
      %p219 = scmp.le.s32.totalorder 1, %s18
      %p220 = scmp.lt.s32.totalorder %s18, 3
      %p221 = pnand %p219, %p220
      %p222 = pneg %p221
      // Predicated region
      $region29: #{tpu_custom_call.1} parent=5 // pred_check
        _
      $region30: #{tpu_custom_call.1} parent=5 // pred_check_branch
        %224 = sbr.rel (%p221) target = $region32
      $region31: #{tpu_custom_call.1} parent=5 // pred_region
        %s225 = ssub.s32 %s18, 1
        %s226 = sand.u32 %s45, 1
        %s227 = scalar_lea.sflag [#allocation4], %s226
        %s228 = sand.u32 %s45, 1
        %s229 = smul.addr %s228, 64
        %s230 = scalar_lea.vmem [#allocation3], %s229
        // Predicated region
        $region33: #{tpu_custom_call.1} parent=31 // pred_check
          %p231 = pneg %p58
        $region34: #{tpu_custom_call.1} parent=31 // pred_check_branch
          %233 = sbr.rel (%p231) target = $region36
        $region35: #{tpu_custom_call.1} parent=31 // pred_region
          %234 = dma.done %s227, 1024
        $region36: #{tpu_custom_call.1} parent=31 // pred_fallthru
          _
        %s235 = sand.u32 %s23, 1
        %s236 = scalar_lea.sflag [#allocation7], %s235
        %s237 = sand.u32 %s73, 1
        %s238 = smul.addr %s237, 64
        %s239 = scalar_lea.vmem [#allocation6], %s238
        // Predicated region
        $region37: #{tpu_custom_call.1} parent=31 // pred_check
          %p240 = pneg %p86
        $region38: #{tpu_custom_call.1} parent=31 // pred_check_branch
          %242 = sbr.rel (%p240) target = $region40
        $region39: #{tpu_custom_call.1} parent=31 // pred_region
          %243 = dma.done %s236, 1024
        $region40: #{tpu_custom_call.1} parent=31 // pred_fallthru
          _
        %s244 = sand.u32 %s23, 1
        %s245 = scalar_lea.sflag [#allocation7], %s244
        %s246 = sand.u32 %s101, 1
        %s247 = smul.addr %s246, 64
        %s248 = scalar_lea.vmem [#allocation8], %s247
        // Predicated region
        $region41: #{tpu_custom_call.1} parent=31 // pred_check
          %p249 = pneg %p114
        $region42: #{tpu_custom_call.1} parent=31 // pred_check_branch
          %251 = sbr.rel (%p249) target = $region44
        $region43: #{tpu_custom_call.1} parent=31 // pred_region
          %252 = dma.done %s245, 1024
        $region44: #{tpu_custom_call.1} parent=31 // pred_fallthru
          _
        %s253 = sand.u32 %s45, 1
        %s254 = scalar_lea.sflag [#allocation4], %s253
        %s255 = sand.u32 %s45, 1
        %s256 = smul.addr %s255, 64
        %s257 = scalar_lea.vmem [#allocation3], %s256
        %p258 = pneg %p58
        %p259 = pneg %p55
        %s260 = sand.u32 %s23, 1
        %s261 = scalar_lea.sflag [#allocation7], %s260
        %s262 = sand.u32 %s73, 1
        %s263 = smul.addr %s262, 64
        %s264 = scalar_lea.vmem [#allocation6], %s263
        %p265 = pneg %p86
        %p266 = pneg %p83
        %s267 = sand.u32 %s23, 1
        %s268 = scalar_lea.sflag [#allocation7], %s267
        %s269 = sand.u32 %s101, 1
        %s270 = smul.addr %s269, 64
        %s271 = scalar_lea.vmem [#allocation8], %s270
        %p272 = pneg %p114
        %p273 = pneg %p111
        %p274 = pneg %p140
        %p275 = pneg %p137
        %s276 = sand.u32 %s127, 1
        %s277 = scalar_lea.sflag [#allocation5], %s276
        %s278 = sand.u32 %s127, 1
        %s279 = smul.addr %s278, 64
        %s280 = scalar_lea.vmem [#allocation9], %s279
        %s281 = sadd.s32 %s27, %s28
        %s282 = sadd.s32 %s27, %s28
        %s283 = sadd.s32 %s27, %s28
        %p284 = scmp.eq.s32.totalorder %s28, 0
        // Predicated region
        $region45: #{tpu_custom_call.1} parent=31 // pred_check
          %p285 = pneg %p284
        $region46: #{tpu_custom_call.1} parent=31 // pred_check_branch
          %287 = sbr.rel (%p285) target = $region48
        $region47: #{tpu_custom_call.1} parent=31 // pred_region
          %288 = vst [vmem:[#allocation2] sm:$0xff] 0.0
          %289 = vst [vmem:[#allocation2 + $0x8] sm:$0xff] 0.0
          %290 = vst [vmem:[#allocation2 + $0x10] sm:$0xff] 0.0
          %291 = vst [vmem:[#allocation2 + $0x18] sm:$0xff] 0.0
          %292 = vst [vmem:[#allocation2 + $0x20] sm:$0xff] 0.0
          %293 = vst [vmem:[#allocation2 + $0x28] sm:$0xff] 0.0
          %294 = vst [vmem:[#allocation2 + $0x30] sm:$0xff] 0.0
          %295 = vst [vmem:[#allocation2 + $0x38] sm:$0xff] 0.0
        $region48: #{tpu_custom_call.1} parent=31 // pred_fallthru
          _
        %v296 = vld [vmem:[%s230] sm:$0xff]
        %v297 = vld [vmem:[%s230 + $0x8] sm:$0xff]
        %v298 = vld [vmem:[%s230 + $0x10] sm:$0xff]
        %v299 = vld [vmem:[%s230 + $0x18] sm:$0xff]
        %v300 = vld [vmem:[%s230 + $0x20] sm:$0xff]
        %v301 = vld [vmem:[%s230 + $0x28] sm:$0xff]
        %v302 = vld [vmem:[%s230 + $0x30] sm:$0xff]
        %v303 = vld [vmem:[%s230 + $0x38] sm:$0xff]
        %v304 = vld [vmem:[%s239] sm:$0xff]
        %v305 = vld [vmem:[%s239 + $0x8] sm:$0xff]
        %v306 = vld [vmem:[%s239 + $0x10] sm:$0xff]
        %v307 = vld [vmem:[%s239 + $0x18] sm:$0xff]
        %v308 = vld [vmem:[%s239 + $0x20] sm:$0xff]
        %v309 = vld [vmem:[%s239 + $0x28] sm:$0xff]
        %v310 = vld [vmem:[%s239 + $0x30] sm:$0xff]
        %v311 = vld [vmem:[%s239 + $0x38] sm:$0xff]
        %v312 = vld [vmem:[%s248] sm:$0xff]
        %v313 = vld [vmem:[%s248 + $0x8] sm:$0xff]
        %v314 = vld [vmem:[%s248 + $0x10] sm:$0xff]
        %v315 = vld [vmem:[%s248 + $0x18] sm:$0xff]
        %v316 = vld [vmem:[%s248 + $0x20] sm:$0xff]
        %v317 = vld [vmem:[%s248 + $0x28] sm:$0xff]
        %v318 = vld [vmem:[%s248 + $0x30] sm:$0xff]
        %v319 = vld [vmem:[%s248 + $0x38] sm:$0xff]
        %v320 = vsub.f32 %v296, %v304
        %v321 = vsub.f32 %v297, %v305
        %v322 = vsub.f32 %v298, %v306
        %v323 = vsub.f32 %v299, %v307
        %v324 = vsub.f32 %v300, %v308
        %v325 = vsub.f32 %v301, %v309
        %v326 = vsub.f32 %v302, %v310
        %v327 = vsub.f32 %v303, %v311
        %v328 = vmul.f32 %v320, 1.442695
        %v329 = vpow.pop %v328
        %v330 = vmul.f32 %v321, 1.442695
        %v331 = vpow.pop %v330
        %v332 = vmul.f32 %v322, 1.442695
        %v333 = vpow.pop %v332
        %v334 = vmul.f32 %v323, 1.442695
        %v335 = vpow.pop %v334
        %v336 = vmul.f32 %v324, 1.442695
        %v337 = vpow.pop %v336
        %v338 = vmul.f32 %v325, 1.442695
        %v339 = vpow.pop %v338
        %v340 = vmul.f32 %v326, 1.442695
        %v341 = vpow.pop %v340
        %v342 = vmul.f32 %v327, 1.442695
        %v343 = vpow.pop %v342
        %v344 = vmax.f32 %v329, 0.8
        %v345 = vmax.f32 %v331, 0.8
        %v346 = vmax.f32 %v333, 0.8
        %v347 = vmax.f32 %v335, 0.8
        %v348 = vmax.f32 %v337, 0.8
        %v349 = vmax.f32 %v339, 0.8
        %v350 = vmax.f32 %v341, 0.8
        %v351 = vmax.f32 %v343, 0.8
        %v352 = vmin.f32 %v344, 1.2
        %v353 = vmin.f32 %v345, 1.2
        %v354 = vmin.f32 %v346, 1.2
        %v355 = vmin.f32 %v347, 1.2
        %v356 = vmin.f32 %v348, 1.2
        %v357 = vmin.f32 %v349, 1.2
        %v358 = vmin.f32 %v350, 1.2
        %v359 = vmin.f32 %v351, 1.2
        %v360 = vmul.f32 %v329, %v312
        %v361 = vmul.f32 %v331, %v313
        %v362 = vmul.f32 %v333, %v314
        %v363 = vmul.f32 %v335, %v315
        %v364 = vmul.f32 %v337, %v316
        %v365 = vmul.f32 %v339, %v317
        %v366 = vmul.f32 %v341, %v318
        %v367 = vmul.f32 %v343, %v319
        %v368 = vmul.f32 %v352, %v312
        %v369 = vmul.f32 %v353, %v313
        %v370 = vmul.f32 %v354, %v314
        %v371 = vmul.f32 %v355, %v315
        %v372 = vmul.f32 %v356, %v316
        %v373 = vmul.f32 %v357, %v317
        %v374 = vmul.f32 %v358, %v318
        %v375 = vmul.f32 %v359, %v319
        %v376 = vmin.f32 %v360, %v368
        %v377 = vmin.f32 %v361, %v369
        %v378 = vmin.f32 %v362, %v370
        %v379 = vmin.f32 %v363, %v371
        %v380 = vmin.f32 %v364, %v372
        %v381 = vmin.f32 %v365, %v373
        %v382 = vmin.f32 %v366, %v374
        %v383 = vmin.f32 %v367, %v375
        %v384 = vld [vmem:[#allocation2] sm:$0xff]
        %v385 = vld [vmem:[#allocation2 + $0x8] sm:$0xff]
        %v386 = vld [vmem:[#allocation2 + $0x10] sm:$0xff]
        %v387 = vld [vmem:[#allocation2 + $0x18] sm:$0xff]
        %v388 = vld [vmem:[#allocation2 + $0x20] sm:$0xff]
        %v389 = vld [vmem:[#allocation2 + $0x28] sm:$0xff]
        %v390 = vld [vmem:[#allocation2 + $0x30] sm:$0xff]
        %v391 = vld [vmem:[#allocation2 + $0x38] sm:$0xff]
        %v392 = vadd.f32 %v384, %v376
        %v393 = vadd.f32 %v385, %v377
        %v394 = vadd.f32 %v386, %v378
        %v395 = vadd.f32 %v387, %v379
        %v396 = vadd.f32 %v388, %v380
        %v397 = vadd.f32 %v389, %v381
        %v398 = vadd.f32 %v390, %v382
        %v399 = vadd.f32 %v391, %v383
        %400 = vst [vmem:[#allocation2] sm:$0xff] %v392
        %401 = vst [vmem:[#allocation2 + $0x8] sm:$0xff] %v393
        %402 = vst [vmem:[#allocation2 + $0x10] sm:$0xff] %v394
        %403 = vst [vmem:[#allocation2 + $0x18] sm:$0xff] %v395
        %404 = vst [vmem:[#allocation2 + $0x20] sm:$0xff] %v396
        %405 = vst [vmem:[#allocation2 + $0x28] sm:$0xff] %v397
        %406 = vst [vmem:[#allocation2 + $0x30] sm:$0xff] %v398
        %407 = vst [vmem:[#allocation2 + $0x38] sm:$0xff] %v399
        // Predicated region
        $region49: #{tpu_custom_call.1} parent=31 // pred_check
          %p408 = pneg %p284
        $region50: #{tpu_custom_call.1} parent=31 // pred_check_branch
          %410 = sbr.rel (%p408) target = $region52
        $region51: #{tpu_custom_call.1} parent=31 // pred_region
          %v411 = vld [vmem:[#allocation2] sm:$0xff]
          %v412 = vld [vmem:[#allocation2 + $0x8] sm:$0xff]
          %v413 = vld [vmem:[#allocation2 + $0x10] sm:$0xff]
          %v414 = vld [vmem:[#allocation2 + $0x18] sm:$0xff]
          %v415 = vld [vmem:[#allocation2 + $0x20] sm:$0xff]
          %v416 = vld [vmem:[#allocation2 + $0x28] sm:$0xff]
          %v417 = vld [vmem:[#allocation2 + $0x30] sm:$0xff]
          %v418 = vld [vmem:[#allocation2 + $0x38] sm:$0xff]
          %419 = vst [vmem:[%s280] sm:$0xff] %v411
          %420 = vst [vmem:[%s280 + $0x8] sm:$0xff] %v412
          %421 = vst [vmem:[%s280 + $0x10] sm:$0xff] %v413
          %422 = vst [vmem:[%s280 + $0x18] sm:$0xff] %v414
          %423 = vst [vmem:[%s280 + $0x20] sm:$0xff] %v415
          %424 = vst [vmem:[%s280 + $0x28] sm:$0xff] %v416
          %425 = vst [vmem:[%s280 + $0x30] sm:$0xff] %v417
          %426 = vst [vmem:[%s280 + $0x38] sm:$0xff] %v418
        $region52: #{tpu_custom_call.1} parent=31 // pred_fallthru
          _
        %s427 = sand.u32 %s127, 1
        %s428 = scalar_lea.sflag [#allocation5], %s427
        %s429 = sand.u32 %s127, 1
        %s430 = smul.addr %s429, 64
        %s431 = scalar_lea.vmem [#allocation9], %s430
        // Predicated region
        $region53: #{tpu_custom_call.1} parent=31 // pred_check
          %p432 = pneg %p137
        $region54: #{tpu_custom_call.1} parent=31 // pred_check_branch
          %434 = sbr.rel (%p432) target = $region56
        $region55: #{tpu_custom_call.1} parent=31 // pred_region
          %s436 = ssub.s32 1024, 1024
          %437 = vsyncadd %s428, %s436
          %s438 = smul.addr %s27, 8
          %s439 = smul.addr %s438, 128
          %s440 = scalar_lea.hbm %s3, %s439
          %s442 = sshll.u32 %s431, 4
          %s443 = int_to_ptr.vmem [resolvable:$true] %s442
          %445 = dma.vmem_to_hbm [thread:$0]  %s443, 1024, %s440, %s428
        $region56: #{tpu_custom_call.1} parent=31 // pred_fallthru
          _
      $region32: #{tpu_custom_call.1} parent=5 // pred_fallthru
        _
      %p446 = scmp.le.s32.totalorder 2, %s18
      // Predicated region
      $region57: #{tpu_custom_call.1} parent=5 // pred_check
        %p447 = pneg %p446
      $region58: #{tpu_custom_call.1} parent=5 // pred_check_branch
        %449 = sbr.rel (%p447) target = $region60
      $region59: #{tpu_custom_call.1} parent=5 // pred_region
        %s450 = ssub.s32 %s18, 2
        // Predicated region
        $region61: #{tpu_custom_call.1} parent=59 // pred_check
          %p451 = pneg %p143
        $region62: #{tpu_custom_call.1} parent=59 // pred_check_branch
          %453 = sbr.rel (%p451) target = $region64
        $region63: #{tpu_custom_call.1} parent=59 // pred_region
          %s454 = sand.u32 %s128, 1
          %s455 = scalar_lea.sflag [#allocation5], %s454
          %s456 = sand.u32 %s128, 1
          %s457 = smul.addr %s456, 64
          %s458 = scalar_lea.vmem [#allocation9], %s457
          %459 = dma.done %s455, 1024
        $region64: #{tpu_custom_call.1} parent=59 // pred_fallthru
          _
      $region60: #{tpu_custom_call.1} parent=5 // pred_fallthru
        _
    $region6: #{tpu_custom_call.1} parent=1 // loop_footer
      %s22 = sadd.s32 1, %s18
    $region7: #{tpu_custom_call.1} parent=1 // loop_footer_branch
      %17 = sbr.rel target = $region3
    $region8: #{tpu_custom_call.1} parent=1 // loop_exit
      _
    %460 = vsyncpa [#allocation4], 1
    %s461 = scalar_lea.sflag [#allocation4], 1
    %462 = vsyncpa %s461, 1
    %463 = vsyncpa [#allocation7], 1
    %s464 = scalar_lea.sflag [#allocation7], 1
    %465 = vsyncpa %s464, 1
    %466 = vsyncpa [#allocation5], 1
    %s467 = scalar_lea.sflag [#allocation5], 1
    %468 = vsyncpa %s467, 1

</llo_original>
